<compile_context>
chip_gen: v7x
topology: tpu7x:2x2x1
jax: 0.10.0
libtpu: 0.0.40
codegen_flags: <defaults>
</compile_context>

<pallas_src>
import jax
import jax.numpy as jnp
import numpy as np
from jax.experimental import pallas as pl
from jax.experimental.pallas import tpu as pltpu


def _halting_prob_kernel(x_ref, w_ref, b_ref, o_ref):
    # x_ref : (bn, C*H*W)  batch block, features lane-dense (contiguous NCHW view)
    # w_ref : (1,  C*H*W)  per-feature weight map = conv_w[c] / (H*W), resident
    # b_ref : (1, 1)       conv bias, resident
    # o_ref : (bn, 1)      halting probability per batch element
    # Fused AvgPool + 1x1-conv: VPU multiplies + one lane reduce per row.
    logits = jnp.sum(x_ref[...] * w_ref[...], axis=-1, keepdims=True) + b_ref[0, 0]
    o_ref[...] = jax.nn.sigmoid(logits)


def get_halting_prob_forward(x_nchw, w_conv, b_conv, *, target_block_bytes=2 * 1024 * 1024):
    """x_nchw: (N, C, H, W) f32.  w_conv: (1, C, 1, 1) torch Conv2d weight.
    b_conv: (1,) bias.  Returns (N,) == torch forward().flatten()."""
    N, C, H, W = x_nchw.shape
    F = C * H * W

    # Zero-cost contiguous reshape of the native NCHW buffer — no transposes.
    x_flat = x_nchw.reshape(N, F).astype(jnp.float32)

    # Fold the AdaptiveAvgPool2d(1) average into the conv weight, expanded to a
    # lane-dense per-feature map matching the flattened NCHW index c*HW + s.
    w_map = (jnp.repeat(w_conv.reshape(C).astype(jnp.float32), H * W)
             * (1.0 / float(H * W))).reshape(1, F)
    b = b_conv.reshape(1, 1).astype(jnp.float32)

    # Batch-block size: ~target_block_bytes per x block (double-buffered by the
    # pipeline), multiple of 8 sublanes, clamped to N (full dim is also legal).
    row_bytes = F * 4
    bn = max(8, (target_block_bytes // max(row_bytes, 1)) // 8 * 8)
    if bn >= N:
        bn = N
    grid_n = pl.cdiv(N, bn)

    out = pl.pallas_call(
        _halting_prob_kernel,
        out_shape=jax.ShapeDtypeStruct((N, 1), jnp.float32),
        grid_spec=pltpu.PrefetchScalarGridSpec(
            num_scalar_prefetch=0,
            grid=(grid_n,),
            in_specs=[
                pl.BlockSpec((bn, F), lambda i: (i, 0)),   # x: streamed over batch
                pl.BlockSpec((1, F), lambda i: (0, 0)),    # weight map: resident
                pl.BlockSpec((1, 1), lambda i: (0, 0)),    # bias: resident
            ],
            out_specs=pl.BlockSpec((bn, 1), lambda i: (i, 0)),
        ),
        compiler_params=pltpu.CompilerParams(
            dimension_semantics=("parallel",),             # v7x: split batch across TCs
        ),
    )(x_flat, w_map, b)

    return out.reshape(N)


def _reference(x_nchw, w_conv, b_conv):
    """Pure-JAX reference of get_halting_prob.forward (for validation)."""
    pooled = jnp.mean(x_nchw, axis=(2, 3))                                    # (N, C)
    logits = jnp.einsum("nc,oc->no", pooled, w_conv.reshape(1, -1)) + b_conv  # (N, 1)
    return jax.nn.sigmoid(logits).reshape(-1)                                 # (N,)


if __name__ == "__main__":
    key = jax.random.PRNGKey(0)
    k_x, k_w, k_b, k_x2 = jax.random.split(key, 4)

    # Primary test at the module's small shapes.
    N, C, H, W = 2, 4, 16, 16
    x = jax.random.normal(k_x, (N, C, H, W), jnp.float32)
    w = jax.random.normal(k_w, (1, C, 1, 1), jnp.float32) * 0.5   # Conv2d(dim,1,1) weight
    b = jax.random.normal(k_b, (1,), jnp.float32) * 0.5           # Conv2d bias

    out = get_halting_prob_forward(x, w, b)
    out = jax.block_until_ready(out)
    ref = _reference(x, w, b)
    assert out.shape == (N,), out.shape
    np.testing.assert_allclose(np.asarray(out), np.asarray(ref), rtol=1e-5, atol=1e-6)

    # Secondary test that exercises the multi-block grid (including a partial
    # last block) by forcing a small block budget.
    N2 = 20
    x2 = jax.random.normal(k_x2, (N2, C, H, W), jnp.float32)
    out2 = get_halting_prob_forward(x2, w, b, target_block_bytes=32 * 1024)   # bn=8, grid=3
    out2 = jax.block_until_ready(out2)
    ref2 = _reference(x2, w, b)
    assert out2.shape == (N2,), out2.shape
    np.testing.assert_allclose(np.asarray(out2), np.asarray(ref2), rtol=1e-5, atol=1e-6)

    print("KERNEL_OK")
</pallas_src>

<mosaic_0001>
module attributes {stable_mosaic.version = 11 : i64} {
  func.func @_halting_prob_kernel(%arg0: i32, %arg1: memref<2x1024xf32, #tpu.memory_space<vmem>>, %arg2: memref<1x1024xf32, #tpu.memory_space<vmem>>, %arg3: memref<1x1xf32, #tpu.memory_space<vmem>>, %arg4: memref<2x1xf32, #tpu.memory_space<vmem>>) attributes {dimension_semantics = [#tpu.dimension_semantics<parallel>], iteration_bounds = array<i64: 1>, scalar_prefetch = 0 : i64, scratch_operands = 0 : i64, tpu.core_type = #tpu.core_type<tc>, window_params = [{transform_indices = @transform_0, window_bounds = array<i64: 2, 1024>}, {pipeline_mode = #tpu.pipeline_mode<synchronous>, transform_indices = @transform_1, window_bounds = array<i64: 1, 1024>}, {pipeline_mode = #tpu.pipeline_mode<synchronous>, transform_indices = @transform_2, window_bounds = array<i64: 1, 1>}, {transform_indices = @transform_3, window_bounds = array<i64: 2, 1>}]} {
    %c0 = arith.constant 0 : index
    %c0_0 = arith.constant 0 : index
    %0 = vector.load %arg1[%c0, %c0_0] : memref<2x1024xf32, #tpu.memory_space<vmem>>, vector<2x1024xf32>
    %c0_1 = arith.constant 0 : index
    %c0_2 = arith.constant 0 : index
    %1 = vector.load %arg2[%c0_1, %c0_2] : memref<1x1024xf32, #tpu.memory_space<vmem>>, vector<1x1024xf32>
    %2 = vector.broadcast %1 : vector<1x1024xf32> to vector<2x1024xf32>
    %3 = arith.mulf %0, %2 : vector<2x1024xf32>
    %cst = arith.constant dense<0.000000e+00> : vector<2xf32>
    %4 = vector.multi_reduction <add>, %3, %cst [1] : vector<2x1024xf32> to vector<2xf32>
    %5 = vector.shape_cast %4 : vector<2xf32> to vector<2x1xf32>
    %c0_3 = arith.constant 0 : index
    %c0_4 = arith.constant 0 : index
    %6 = vector.load %arg3[%c0_3, %c0_4] : memref<1x1xf32, #tpu.memory_space<vmem>>, vector<1x1xf32>
    %7 = vector.extract %6[0, 0] : f32 from vector<1x1xf32>
    %8 = vector.broadcast %7 : f32 to vector<2x1xf32>
    %9 = arith.addf %5, %8 : vector<2x1xf32>
    %10 = arith.negf %9 : vector<2x1xf32>
    %11 = math.exp %10 : vector<2x1xf32>
    %cst_5 = arith.constant 1.000000e+00 : f32
    %12 = vector.broadcast %cst_5 : f32 to vector<2x1xf32>
    %13 = arith.addf %12, %11 : vector<2x1xf32>
    %14 = arith.divf %12, %13 : vector<2x1xf32>
    %c0_6 = arith.constant 0 : index
    %c0_7 = arith.constant 0 : index
    %15 = vector.load %arg4[%c0_6, %c0_7] : memref<2x1xf32, #tpu.memory_space<vmem>>, vector<2x1xf32>
    tpu.vector_store %arg4[%c0_6, %c0_7], %14 {strides = array<i32>} : memref<2x1xf32, #tpu.memory_space<vmem>>, vector<2x1xf32>,
    return
  }
  func.func @transform_0(%arg0: i32) -> (i32, i32) {
    %c0_i32 = arith.constant 0 : i32
    %c0_i32_0 = arith.constant 0 : i32
    return %arg0, %c0_i32 : i32, i32
  }
  func.func @transform_1(%arg0: i32) -> (i32, i32) {
    %c0_i32 = arith.constant 0 : i32
    %c0_i32_0 = arith.constant 0 : i32
    %c0_i32_1 = arith.constant 0 : i32
    return %c0_i32, %c0_i32_0 : i32, i32
  }
  func.func @transform_2(%arg0: i32) -> (i32, i32) {
    %c0_i32 = arith.constant 0 : i32
    %c0_i32_0 = arith.constant 0 : i32
    %c0_i32_1 = arith.constant 0 : i32
    return %c0_i32, %c0_i32_0 : i32, i32
  }
  func.func @transform_3(%arg0: i32) -> (i32, i32) {
    %c0_i32 = arith.constant 0 : i32
    %c0_i32_0 = arith.constant 0 : i32
    return %arg0, %c0_i32 : i32, i32
  }
}

</mosaic_0001>

<llo_original>
// kernel: tpu_custom_call.1
$region0: #{tpu_custom_call.1}
  #allocation0 [shape = 'u32[]', space=smem, size = 0x4, offset = 0x4, fixed_abs, tag = 'smem constant byte address 0x4 - core index']
  #allocation1 [shape = 'u32[144,128]{1,0:T(1,128)}', space=vmem, size = 0x12000, scoped, tag = 'internal scratch']
  #allocation2 [shape = 'f32[1,1]{1,0:T(1,128)S(1)}', space=vmem, size = 0x200, scoped, tag = 'scoped memory for tpu_custom_call.1']
  %s0 = inlined_call_operand.hbm [shape: f32[2,1024], index: 0, kind: input, shape index: {}]
  %s1 = inlined_call_operand.hbm [shape: f32[1,1024], index: 1, kind: input, shape index: {}]
  %s2 = inlined_call_operand.<no memory space> [shape: f32[1,1], index: 2, kind: input, shape index: {}]
  %s3 = inlined_call_operand.vmem [shape: f32[2,1], index: 3, kind: output, shape index: {}]
  %s4 = sld [smem:[#allocation0]]
  $region30: #{tpu_custom_call.1} parent=0
    _
  %s6 = ssub.s32 1, %s4
  %s7 = scalar_select 0, %s6, %s4
  %v8 = vstv %s2
  %9 = vst [vmem:[#allocation2] sm:$0x1] %v8
  $region1: #{tpu_custom_call.1} parent=0
    #allocation3 [shape = 'u8[8192]{0}', space=vmem, size = 0x2000, scoped, tag = 'input window, operand 0, single buffered']
    #allocation4 [shape = 's32[1]{0}', space=sflag, size = 0x4, scoped, tag = 'scoped memory for tpu_custom_call.1']
    #allocation5 [shape = 'u8[4096]{0}', space=vmem, size = 0x1000, scoped, tag = 'input window, operand 1, single buffered']
    #allocation6 [shape = 's32[1]{0}', space=sflag, size = 0x4, scoped, tag = 'scoped memory for tpu_custom_call.1']
    %10 = vsyncpa [#allocation4], 0
    %11 = vsyncpa [#allocation6], 0
    // Predicated region
    $region2: #{tpu_custom_call.1} parent=1 // pred_check
      _
    $region3: #{tpu_custom_call.1} parent=1 // pred_check_branch
      %13 = sbr.rel (0) target = $region5
    $region4: #{tpu_custom_call.1} parent=1 // pred_region
      %s15 = ssub.s32 256, 256
      %16 = vsyncadd [#allocation4], %s15
      %s18 = sshll.u32 [#allocation3], 4
      %s19 = int_to_ptr.vmem [resolvable:$true] %s18
      %21 = dma.hbm_to_vmem [thread:$0]  %s0, 256, %s19, [#allocation4]
    $region5: #{tpu_custom_call.1} parent=1 // pred_fallthru
      _
    // Predicated region
    $region6: #{tpu_custom_call.1} parent=1 // pred_check
      _
    $region7: #{tpu_custom_call.1} parent=1 // pred_check_branch
      %23 = sbr.rel (0) target = $region9
    $region8: #{tpu_custom_call.1} parent=1 // pred_region
      %s25 = ssub.s32 128, 128
      %26 = vsyncadd [#allocation6], %s25
      %s28 = sshll.u32 [#allocation5], 4
      %s29 = int_to_ptr.vmem [resolvable:$true] %s28
      %31 = dma.hbm_to_vmem [thread:$0]  %s1, 128, %s29, [#allocation6]
    $region9: #{tpu_custom_call.1} parent=1 // pred_fallthru
      _
    // Predicated region
    $region10: #{tpu_custom_call.1} parent=1 // pred_check
      _
    $region11: #{tpu_custom_call.1} parent=1 // pred_check_branch
      %33 = sbr.rel (0) target = $region13
    $region12: #{tpu_custom_call.1} parent=1 // pred_region
      _
    $region13: #{tpu_custom_call.1} parent=1 // pred_fallthru
      _
    // Predicated region
    $region14: #{tpu_custom_call.1} parent=1 // pred_check
      _
    $region15: #{tpu_custom_call.1} parent=1 // pred_check_branch
      %35 = sbr.rel (0) target = $region17
    $region16: #{tpu_custom_call.1} parent=1 // pred_region
      %36 = dma.done [#allocation4], 256
    $region17: #{tpu_custom_call.1} parent=1 // pred_fallthru
      _
    // Predicated region
    $region18: #{tpu_custom_call.1} parent=1 // pred_check
      _
    $region19: #{tpu_custom_call.1} parent=1 // pred_check_branch
      %38 = sbr.rel (0) target = $region21
    $region20: #{tpu_custom_call.1} parent=1 // pred_region
      %39 = dma.done [#allocation6], 128
    $region21: #{tpu_custom_call.1} parent=1 // pred_fallthru
      _
    %v40 = vld [vmem:[#allocation3] sm:$0xff]
    %v41 = vld [vmem:[#allocation3 + $0x8] sm:$0xff]
    %v42 = vld [vmem:[#allocation5] sm:$0xff]
    %v44 = vlaneseq
    %v45 = vshrl.u32 %v44, 7
    %v46 = vsub.s32 0, %v45
    %v47 = vrot.slane %v42, %v46
    %v48 = vlaneseq
    %v49 = vshrl.u32 %v48, 7
    %v50 = vsub.s32 1, %v49
    %v51 = vrot.slane %v42, %v50
    %v52 = vlaneseq
    %v53 = vshrl.u32 %v52, 7
    %v54 = vsub.s32 2, %v53
    %v55 = vrot.slane %v42, %v54
    %v56 = vlaneseq
    %v57 = vshrl.u32 %v56, 7
    %v58 = vsub.s32 3, %v57
    %v59 = vrot.slane %v42, %v58
    %v60 = vlaneseq
    %v61 = vshrl.u32 %v60, 7
    %v62 = vsub.s32 4, %v61
    %v63 = vrot.slane %v42, %v62
    %v64 = vlaneseq
    %v65 = vshrl.u32 %v64, 7
    %v66 = vsub.s32 5, %v65
    %v67 = vrot.slane %v42, %v66
    %v68 = vlaneseq
    %v69 = vshrl.u32 %v68, 7
    %v70 = vsub.s32 6, %v69
    %v71 = vrot.slane %v42, %v70
    %v72 = vlaneseq
    %v73 = vshrl.u32 %v72, 7
    %v74 = vsub.s32 7, %v73
    %v75 = vrot.slane %v42, %v74
    %v76 = vcombine.low %v47, %v51
    %v77 = vcombine.low %v55, %v59
    %v79 = vunpack.c.l.s4 1983009808
    %v80 = vunpack.c.0.s8 %v79
    %v81 = vlaneseq
    %v82 = vshrl.u32 %v81, 7
    %v83 = vsub.s32 %v80, %v82
    %v84 = vrot.slane %v76, %v83
    %v86 = vunpack.c.l.s4 1983009808
    %v87 = vunpack.c.0.s8 %v86
    %v88 = vlaneseq
    %v89 = vshrl.u32 %v88, 7
    %v90 = vsub.s32 %v87, %v89
    %v91 = vrot.slane %v77, %v90
    %v92 = vcombine.low %v84, %v91
    %v93 = vcombine.low %v63, %v67
    %v94 = vcombine.low %v71, %v75
    %v96 = vunpack.c.l.s4 1983009808
    %v97 = vunpack.c.0.s8 %v96
    %v98 = vlaneseq
    %v99 = vshrl.u32 %v98, 7
    %v100 = vsub.s32 %v97, %v99
    %v101 = vrot.slane %v93, %v100
    %v103 = vunpack.c.l.s4 1983009808
    %v104 = vunpack.c.0.s8 %v103
    %v105 = vlaneseq
    %v106 = vshrl.u32 %v105, 7
    %v107 = vsub.s32 %v104, %v106
    %v108 = vrot.slane %v94, %v107
    %v109 = vcombine.low %v101, %v108
    %v112 = vmul.f32 %v40, %v92
    %v113 = vmul.f32 %v41, %v109
    %v116 = vcombine.high %v112, %v112
    %v118 = vunpack.c.l.s4 1983009808
    %v119 = vunpack.c.0.s8 %v118
    %v120 = vlaneseq
    %v121 = vshrl.u32 %v120, 7
    %v122 = vsub.s32 %v119, %v121
    %v123 = vrot.slane %v112, %v122
    %v125 = vunpack.c.l.s4 1983009808
    %v126 = vunpack.c.0.s8 %v125
    %v127 = vlaneseq
    %v128 = vshrl.u32 %v127, 7
    %v129 = vsub.s32 %v126, %v128
    %v130 = vrot.slane %v116, %v129
    %v131 = vcombine.high %v123, %v123
    %v132 = vcombine.high %v130, %v130
    %v133 = vcombine.high %v113, %v113
    %v135 = vunpack.c.l.s4 1983009808
    %v136 = vunpack.c.0.s8 %v135
    %v137 = vlaneseq
    %v138 = vshrl.u32 %v137, 7
    %v139 = vsub.s32 %v136, %v138
    %v140 = vrot.slane %v113, %v139
    %v142 = vunpack.c.l.s4 1983009808
    %v143 = vunpack.c.0.s8 %v142
    %v144 = vlaneseq
    %v145 = vshrl.u32 %v144, 7
    %v146 = vsub.s32 %v143, %v145
    %v147 = vrot.slane %v133, %v146
    %v148 = vcombine.high %v140, %v140
    %v149 = vcombine.high %v147, %v147
    %vm158 = vcmask 1041408
    %v159 = vsel %vm158, %v123, 0.0
    %v160 = vsel %vm158, %v131, 0.0
    %v161 = vadd.f32 %v159, %v160
    %v162 = vsel %vm158, %v130, 0.0
    %v163 = vadd.f32 %v161, %v162
    %v164 = vsel %vm158, %v132, 0.0
    %v165 = vadd.f32 %v163, %v164
    %v166 = vsel %vm158, %v140, 0.0
    %v167 = vadd.f32 %v165, %v166
    %v168 = vsel %vm158, %v148, 0.0
    %v169 = vadd.f32 %v167, %v168
    %v170 = vsel %vm158, %v147, 0.0
    %v171 = vadd.f32 %v169, %v170
    %v172 = vsel %vm158, %v149, 0.0
    %v173 = vadd.f32 %v171, %v172
    %174 = vadd.xlane.f32.xlu0 %v173
    %v175 = vpop.xlane.xlu0 %174
    %v176 = vld [vmem:[#allocation2] sm:$0x1]
    %s177 = vtos %v176
    %v178 = vstv %s177
    %v179 = vadd.f32 %v175, %v178
    %v180 = vxor.u32 %v179, 2147483648
    %v181 = vmul.f32 %v180, 1.442695
    %v182 = vpow.pop %v181
    %v183 = vadd.f32 %v182, 1.0
    %v184 = vrcp.pop %v183
    %v185 = vmul.f32 1.0, %v184
    %vm186 = vcmask 1024
    %187 = vst.msk [vmem:[%s3] sm:$0x3] %vm186, %v185
    // Predicated region
    $region22: #{tpu_custom_call.1} parent=1 // pred_check
      _
    $region23: #{tpu_custom_call.1} parent=1 // pred_check_branch
      %189 = sbr.rel (0) target = $region25
    $region24: #{tpu_custom_call.1} parent=1 // pred_region
      _
    $region25: #{tpu_custom_call.1} parent=1 // pred_fallthru
      _
    // Predicated region
    $region26: #{tpu_custom_call.1} parent=1 // pred_check
      _
    $region27: #{tpu_custom_call.1} parent=1 // pred_check_branch
      %191 = sbr.rel (0) target = $region29
    $region28: #{tpu_custom_call.1} parent=1 // pred_region
      _
    $region29: #{tpu_custom_call.1} parent=1 // pred_fallthru
      _
    %192 = vsyncpa [#allocation4], 1
    %193 = vsyncpa [#allocation6], 1

</llo_original>
